<compile_context>
chip_gen: v5e
topology: v5e:2x2
jax: 0.10.0
libtpu: 0.0.40
codegen_flags: <defaults>
</compile_context>

<pallas_src>
import jax
import jax.numpy as jnp
from jax.experimental import pallas as pl
from jax.experimental.pallas import tpu as pltpu


# --------------------------------------------------------------------------
# Kernels
# --------------------------------------------------------------------------
def _sigmoid(x):
    # exp runs on the (otherwise idle) EUP; exact divide keeps f32 accuracy
    # (pl.reciprocal(approx=True) would cost ~1e-3 abs error on the output).
    return 1.0 / (1.0 + jnp.exp(-x))


def _controller_kernel(x_ref, w1_ref, b1_ref, w2_ref, o_ref):
    """General path. x:(TB,D) w1:(D,8) b1:(1,8) w2:(1,8) -> o:(1,TB)."""
    z1 = jnp.dot(x_ref[...], w1_ref[...], preferred_element_type=jnp.float32)
    z1 = jnp.maximum(z1 + b1_ref[...], 0.0)               # bias + relu (VPU)
    weighted = z1 * w2_ref[...]                           # w2^T as a scale (VPU)
    # 8 -> 1 projection via XLU transpose + sublane reduce; result is already
    # the lane-dense (1, TB) output slab.
    logits = jnp.sum(weighted.T, axis=0, keepdims=True)
    o_ref[...] = _sigmoid(logits).astype(o_ref.dtype)


def _controller_kernel_packed(x_ref, w1bd_ref, b1_ref, w2bd_ref, o_ref):
    """Small-D packed path: P = 128 // D logical rows per physical row.

    x:(TBp, P*D=128) @ block-diag W1 (128, 8P) -> z:(TBp, 8P); relu(z + tiled
    bias); block-diag w2 (8P, P) folds the 8->1 projection into a second
    (cheap) MXU pass -> (TBp, P) logits. No XLU transpose anywhere.
    """
    z1 = jnp.dot(x_ref[...], w1bd_ref[...], preferred_element_type=jnp.float32)
    z1 = jnp.maximum(z1 + b1_ref[...], 0.0)
    logits = jnp.dot(z1, w2bd_ref[...], preferred_element_type=jnp.float32)
    o_ref[...] = _sigmoid(logits).astype(o_ref.dtype)


# --------------------------------------------------------------------------
# Tiling / VMEM sizing helpers
# --------------------------------------------------------------------------
def _round_up(n, m):
    return ((n + m - 1) // m) * m


def _round_down(n, m):
    return (n // m) * m


def _vmem_limit_bytes():
    """Per-generation scoped-VMEM budget (~75% of physical)."""
    try:
        cap = int(pltpu.get_tpu_info().vmem_capacity_bytes)
    except Exception:
        cap = 64 << 20          # conservative fallback: smallest part (v7x)
    # 96 MiB on 128-MiB parts (v5e/v6e), 48 MiB on 64-MiB v7x.
    return max(32 << 20, min((cap * 3) // 4, 112 << 20))


def _choose_tile_rows(rows, row_bytes, *, granule=128, target_bytes=4 << 20,
                      min_tile_bytes=1 << 20, vmem_budget=48 << 20,
                      resident_bytes=0, min_tiles=4):
    """Rows per grid step.

    * ~target_bytes of x per step (amortizes the ~0.35 us / ~600 cycle
      per-grid-step pipeline overhead).
    * 2 double-buffered x tiles + resident weights must fit the VMEM budget.
    * keep >= min_tiles steps (v7x megacore sharding) as long as each step
      still moves >= min_tile_bytes.
    * ragged blocks only at the tail (tile never exceeds the aligned extent).
    """
    if rows <= granule:
        return rows                                   # single exact block
    tb = max(granule, _round_down(target_bytes // row_bytes, granule))
    usable = max(vmem_budget - resident_bytes, 2 * granule * row_bytes)
    tb = min(tb, max(granule, _round_down(usable // (2 * row_bytes), granule)))
    per_step = _round_up(-(-rows // min_tiles), granule)
    if per_step * row_bytes >= min_tile_bytes:
        tb = min(tb, per_step)
    return max(granule, min(tb, _round_down(rows, granule)))


# --------------------------------------------------------------------------
# Forward wrapper
# --------------------------------------------------------------------------
def controller_forward(x, w1, b1, w2, *, target_tile_bytes=4 << 20):
    """x:(B, dim1) f32, w1:(dim1, 8), b1:(8,), w2:(8, 1) -> (B, 1) f32."""
    B, D = x.shape
    assert w1.shape == (D, 8) and b1.shape == (8,) and w2.shape == (8, 1)

    vmem_limit = _vmem_limit_bytes()
    params = pltpu.CompilerParams(
        dimension_semantics=("parallel",),     # megacore shard on v7x; no-op v5e/v6e
        vmem_limit_bytes=vmem_limit,
    )

    pack_ok = (D < 128) and (128 % D == 0)
    P = (128 // D) if pack_ok else 1

    if pack_ok and B >= P and B % P == 0:
        # ---------------- small-D K-packed path ----------------
        rows = B // P
        xp = x.reshape(rows, P * D)                      # contiguous merge -> lane-dense rows
        w1_bd = jnp.kron(jnp.eye(P, dtype=w1.dtype), w1)  # (P*D, 8P) block-diagonal
        w2_bd = jnp.kron(jnp.eye(P, dtype=w2.dtype), w2)  # (8P, P)   block-diagonal
        b1_t = jnp.tile(b1.reshape(1, 8), (1, P))         # (1, 8P)

        row_bytes = 4 * P * D                            # 512 B, already lane-dense
        resident = 4 * (P * D) * 128 + (64 << 10)        # lane-padded resident W1 + misc
        tbp = _choose_tile_rows(rows, row_bytes,
                                target_bytes=target_tile_bytes,
                                vmem_budget=vmem_limit, resident_bytes=resident)

        out = pl.pallas_call(
            _controller_kernel_packed,
            out_shape=jax.ShapeDtypeStruct((rows, P), jnp.float32),
            grid=(pl.cdiv(rows, tbp),),
            in_specs=[
                pl.BlockSpec((tbp, P * D), lambda i: (i, 0)),     # x tiles (pipelined)
                pl.BlockSpec((P * D, 8 * P), lambda i: (0, 0)),   # block-diag W1 resident
                pl.BlockSpec((1, 8 * P), lambda i: (0, 0)),       # tiled bias resident
                pl.BlockSpec((8 * P, P), lambda i: (0, 0)),       # block-diag w2 resident
            ],
            out_specs=pl.BlockSpec((tbp, P), lambda i: (i, 0)),
            compiler_params=params,
        )(xp, w1_bd, b1_t, w2_bd)
        # (rows, P) row-major is exactly the B logits in batch order.
        return out.reshape(B, 1)

    # ---------------- general path (any D, any B) ----------------
    # TODO(synk): for extreme dim1 where even a 128-row tile (2*128*D*4 + 512*D)
    # exceeds the VMEM budget, add a K grid axis with a (TB, 8) accumulator.
    rows = B
    row_bytes = 4 * _round_up(D, 128)                    # VMEM rows are lane-padded
    resident = 4 * D * 128 + (64 << 10)                  # lane-padded resident w1 + misc
    tb = _choose_tile_rows(rows, row_bytes,
                           target_bytes=target_tile_bytes,
                           vmem_budget=vmem_limit, resident_bytes=resident)

    out = pl.pallas_call(
        _controller_kernel,
        out_shape=jax.ShapeDtypeStruct((1, B), jnp.float32),
        grid=(pl.cdiv(B, tb),),
        in_specs=[
            pl.BlockSpec((tb, D), lambda i: (i, 0)),     # x tiles (pipelined)
            pl.BlockSpec((D, 8), lambda i: (0, 0)),      # w1 resident
            pl.BlockSpec((1, 8), lambda i: (0, 0)),      # b1 resident
            pl.BlockSpec((1, 8), lambda i: (0, 0)),      # w2 resident
        ],
        out_specs=pl.BlockSpec((1, tb), lambda i: (0, i)),   # lane-dense slab
        compiler_params=params,
    )(x, w1, b1.reshape(1, 8), w2.reshape(1, 8))
    return out.reshape(B, 1)


# --------------------------------------------------------------------------
# Reference + params
# --------------------------------------------------------------------------
def init_params(key, dim1):
    """Deterministic init mimicking nn.Linear default (U[-1/sqrt(fan_in), +])."""
    k1, k2, k3 = jax.random.split(key, 3)
    bound1 = 1.0 / jnp.sqrt(dim1)
    w1 = jax.random.uniform(k1, (dim1, 8), jnp.float32, -bound1, bound1)
    b1 = jax.random.uniform(k2, (8,), jnp.float32, -bound1, bound1)
    bound2 = 1.0 / jnp.sqrt(8.0)
    w2 = jax.random.uniform(k3, (8, 1), jnp.float32, -bound2, bound2)
    return w1, b1, w2


def reference_forward(x, w1, b1, w2):
    z1 = jnp.maximum(x @ w1 + b1, 0.0)
    return jax.nn.sigmoid(z1 @ w2)


if __name__ == "__main__":
    key = jax.random.PRNGKey(0)
    kp, kx1, kx2, kx3, kp2, kx4 = jax.random.split(key, 6)

    dim1 = 32
    w1, b1, w2 = init_params(kp, dim1)

    # (1) Module-spec small case (batch=2): B % (128//D) != 0 -> general path,
    #     single exact block.
    x1 = jax.random.normal(kx1, (2, dim1), jnp.float32)
    o1 = jax.block_until_ready(controller_forward(x1, w1, b1, w2))
    r1 = reference_forward(x1, w1, b1, w2)
    assert o1.shape == (2, 1)
    assert jnp.allclose(o1, r1, atol=1e-5, rtol=1e-5)

    # (2) Packed small-D path, single tile (batch=300 -> 75 packed rows).
    x2 = jax.random.normal(kx2, (300, dim1), jnp.float32)
    o2 = jax.block_until_ready(controller_forward(x2, w1, b1, w2))
    r2 = reference_forward(x2, w1, b1, w2)
    assert o2.shape == (300, 1)
    assert jnp.allclose(o2, r2, atol=1e-5, rtol=1e-5)

    # (3) Packed path, multiple grid steps + ragged tail block (250 packed rows).
    x3 = jax.random.normal(kx3, (1000, dim1), jnp.float32)
    o3 = jax.block_until_ready(controller_forward(x3, w1, b1, w2))
    r3 = reference_forward(x3, w1, b1, w2)
    assert o3.shape == (1000, 1)
    assert jnp.allclose(o3, r3, atol=1e-5, rtol=1e-5)

    # (4) General path with D that does not divide 128, multi-step + ragged tail.
    dim1b = 72
    w1b, b1b, w2b = init_params(kp2, dim1b)
    x4 = jax.random.normal(kx4, (300, dim1b), jnp.float32)
    o4 = jax.block_until_ready(controller_forward(x4, w1b, b1b, w2b))
    r4 = reference_forward(x4, w1b, b1b, w2b)
    assert o4.shape == (300, 1)
    assert jnp.allclose(o4, r4, atol=1e-5, rtol=1e-5)

    print("KERNEL_OK")
</pallas_src>

<mosaic_0001>
module attributes {stable_mosaic.version = 11 : i64} {
  func.func @_controller_kernel(%arg0: i32, %arg1: memref<2x32xf32, #tpu.memory_space<vmem>>, %arg2: memref<32x8xf32, #tpu.memory_space<vmem>>, %arg3: memref<1x8xf32, #tpu.memory_space<vmem>>, %arg4: memref<1x8xf32, #tpu.memory_space<vmem>>, %arg5: memref<1x2xf32, #tpu.memory_space<vmem>>) attributes {dimension_semantics = [#tpu.dimension_semantics<parallel>], iteration_bounds = array<i64: 1>, scalar_prefetch = 0 : i64, scratch_operands = 0 : i64, tpu.core_type = #tpu.core_type<tc>, window_params = [{transform_indices = @transform_0, window_bounds = array<i64: 2, 32>}, {pipeline_mode = #tpu.pipeline_mode<synchronous>, transform_indices = @transform_1, window_bounds = array<i64: 32, 8>}, {pipeline_mode = #tpu.pipeline_mode<synchronous>, transform_indices = @transform_2, window_bounds = array<i64: 1, 8>}, {pipeline_mode = #tpu.pipeline_mode<synchronous>, transform_indices = @transform_3, window_bounds = array<i64: 1, 8>}, {transform_indices = @transform_4, window_bounds = array<i64: 1, 2>}]} {
    %c0 = arith.constant 0 : index
    %c0_0 = arith.constant 0 : index
    %0 = vector.load %arg1[%c0, %c0_0] : memref<2x32xf32, #tpu.memory_space<vmem>>, vector<2x32xf32>
    %c0_1 = arith.constant 0 : index
    %c0_2 = arith.constant 0 : index
    %1 = vector.load %arg2[%c0_1, %c0_2] : memref<32x8xf32, #tpu.memory_space<vmem>>, vector<32x8xf32>
    %cst = arith.constant dense<0.000000e+00> : vector<2x8xf32>
    %2 = tpu.matmul %0, %1, %cst {dimension_numbers = #tpu.dot_dimension_numbers<[1], [0], [0], [1], [0, 0, 1, 1], [], []>} : vector<2x32xf32>, vector<32x8xf32>, vector<2x8xf32> -> vector<2x8xf32>
    %c0_3 = arith.constant 0 : index
    %c0_4 = arith.constant 0 : index
    %3 = vector.load %arg3[%c0_3, %c0_4] : memref<1x8xf32, #tpu.memory_space<vmem>>, vector<1x8xf32>
    %4 = vector.broadcast %3 : vector<1x8xf32> to vector<2x8xf32>
    %5 = arith.addf %2, %4 : vector<2x8xf32>
    %cst_5 = arith.constant 0.000000e+00 : f32
    %6 = vector.broadcast %cst_5 : f32 to vector<2x8xf32>
    %7 = arith.maximumf %5, %6 : vector<2x8xf32>
    %c0_6 = arith.constant 0 : index
    %c0_7 = arith.constant 0 : index
    %8 = vector.load %arg4[%c0_6, %c0_7] : memref<1x8xf32, #tpu.memory_space<vmem>>, vector<1x8xf32>
    %9 = vector.broadcast %8 : vector<1x8xf32> to vector<2x8xf32>
    %10 = arith.mulf %7, %9 : vector<2x8xf32>
    %11 = tpu.transpose %10, [1, 0] : vector<2x8xf32> -> vector<8x2xf32>
    %cst_8 = arith.constant dense<0.000000e+00> : vector<2xf32>
    %12 = vector.multi_reduction <add>, %11, %cst_8 [0] : vector<8x2xf32> to vector<2xf32>
    %13 = vector.shape_cast %12 : vector<2xf32> to vector<1x2xf32>
    %cst_9 = arith.constant 0.000000e+00 : f32
    %14 = vector.broadcast %cst_9 : f32 to vector<1x2xf32>
    %15 = arith.subf %14, %13 : vector<1x2xf32>
    %16 = math.exp %15 : vector<1x2xf32>
    %cst_10 = arith.constant 1.000000e+00 : f32
    %17 = vector.broadcast %cst_10 : f32 to vector<1x2xf32>
    %18 = arith.addf %17, %16 : vector<1x2xf32>
    %cst_11 = arith.constant 1.000000e+00 : f32
    %19 = vector.broadcast %cst_11 : f32 to vector<1x2xf32>
    %20 = arith.divf %19, %18 : vector<1x2xf32>
    %c0_12 = arith.constant 0 : index
    %c0_13 = arith.constant 0 : index
    %21 = vector.load %arg5[%c0_12, %c0_13] : memref<1x2xf32, #tpu.memory_space<vmem>>, vector<1x2xf32>
    tpu.vector_store %arg5[%c0_12, %c0_13], %20 {strides = array<i32>} : memref<1x2xf32, #tpu.memory_space<vmem>>, vector<1x2xf32>,
    return
  }
  func.func @transform_0(%arg0: i32) -> (i32, i32) {
    %c0_i32 = arith.constant 0 : i32
    %c0_i32_0 = arith.constant 0 : i32
    return %arg0, %c0_i32 : i32, i32
  }
  func.func @transform_1(%arg0: i32) -> (i32, i32) {
    %c0_i32 = arith.constant 0 : i32
    %c0_i32_0 = arith.constant 0 : i32
    %c0_i32_1 = arith.constant 0 : i32
    return %c0_i32, %c0_i32_0 : i32, i32
  }
  func.func @transform_2(%arg0: i32) -> (i32, i32) {
    %c0_i32 = arith.constant 0 : i32
    %c0_i32_0 = arith.constant 0 : i32
    %c0_i32_1 = arith.constant 0 : i32
    return %c0_i32, %c0_i32_0 : i32, i32
  }
  func.func @transform_3(%arg0: i32) -> (i32, i32) {
    %c0_i32 = arith.constant 0 : i32
    %c0_i32_0 = arith.constant 0 : i32
    %c0_i32_1 = arith.constant 0 : i32
    return %c0_i32, %c0_i32_0 : i32, i32
  }
  func.func @transform_4(%arg0: i32) -> (i32, i32) {
    %c0_i32 = arith.constant 0 : i32
    %c0_i32_0 = arith.constant 0 : i32
    return %c0_i32, %arg0 : i32, i32
  }
}

</mosaic_0001>

<llo_original>
// kernel: tpu_custom_call.1
$region0: #{tpu_custom_call.1}
  #allocation0 [shape = 'u32[]', space=smem, size = 0x4, offset = 0x4, fixed_abs, tag = 'smem constant byte address 0x4 - core index']
  #allocation1 [shape = 'u32[72,128]{1,0:T(1,128)}', space=vmem, size = 0x9000, scoped, tag = 'internal scratch']
  %s0 = inlined_call_operand.vmem [shape: f32[2,32], index: 0, kind: input, shape index: {}]
  %s1 = inlined_call_operand.vmem [shape: f32[32,8], index: 1, kind: input, shape index: {}]
  %s2 = inlined_call_operand.vmem [shape: f32[1,8], index: 2, kind: input, shape index: {}]
  %s3 = inlined_call_operand.vmem [shape: f32[1,8], index: 3, kind: input, shape index: {}]
  %s4 = inlined_call_operand.hbm [shape: f32[1,2], index: 4, kind: output, shape index: {}]
  %s5 = sld [smem:[#allocation0]]
  $region26: #{tpu_custom_call.1} parent=0
    _
  %s7 = ssub.s32 1, %s5
  %s8 = scalar_select 0, %s7, %s5
  $region1: #{tpu_custom_call.1} parent=0
    #allocation2 [shape = 'u8[512]{0}', space=vmem, size = 0x400, scoped, tag = 'output window, operand 0, single buffered']
    #allocation3 [shape = 's32[1]{0}', space=sflag, size = 0x4, scoped, tag = 'scoped memory for tpu_custom_call.1']
    %9 = vsyncpa [#allocation3], 0
    // Predicated region
    $region2: #{tpu_custom_call.1} parent=1 // pred_check
      _
    $region3: #{tpu_custom_call.1} parent=1 // pred_check_branch
      %11 = sbr.rel (0) target = $region5
    $region4: #{tpu_custom_call.1} parent=1 // pred_region
      _
    $region5: #{tpu_custom_call.1} parent=1 // pred_fallthru
      _
    // Predicated region
    $region6: #{tpu_custom_call.1} parent=1 // pred_check
      _
    $region7: #{tpu_custom_call.1} parent=1 // pred_check_branch
      %13 = sbr.rel (0) target = $region9
    $region8: #{tpu_custom_call.1} parent=1 // pred_region
      _
    $region9: #{tpu_custom_call.1} parent=1 // pred_fallthru
      _
    // Predicated region
    $region10: #{tpu_custom_call.1} parent=1 // pred_check
      _
    $region11: #{tpu_custom_call.1} parent=1 // pred_check_branch
      %15 = sbr.rel (0) target = $region13
    $region12: #{tpu_custom_call.1} parent=1 // pred_region
      _
    $region13: #{tpu_custom_call.1} parent=1 // pred_fallthru
      _
    // Predicated region
    $region14: #{tpu_custom_call.1} parent=1 // pred_check
      _
    $region15: #{tpu_custom_call.1} parent=1 // pred_check_branch
      %17 = sbr.rel (0) target = $region17
    $region16: #{tpu_custom_call.1} parent=1 // pred_region
      _
    $region17: #{tpu_custom_call.1} parent=1 // pred_fallthru
      _
    %v18 = vld [vmem:[%s0] sm:$0x3]
    %v19 = vld [vmem:[%s1] sm:$0xff]
    %v20 = vld [vmem:[%s1 + $0x8] sm:$0xff]
    %v21 = vld [vmem:[%s1 + $0x10] sm:$0xff]
    %v22 = vld [vmem:[%s1 + $0x18] sm:$0xff]
    %v23 = vld [vmem:[%s2] sm:$0x1]
    %v25 = vperm.slane %v23, 0
    %vm27 = vcmask 261120
    %v29 = vsel %vm27, %v18, 0
    %31 = vmatpush.msra.mxu0 0.0
    %32 = vmatpush.msra.mxu0 0.0
    %33 = vmatpush.msra.mxu0 0.0
    %34 = vmatpush.msra.mxu0 0.0
    %35 = vmatpush.msra.mxu0 0.0
    %36 = vmatpush.msra.mxu0 0.0
    %37 = vmatpush.msra.mxu0 0.0
    %38 = vmatpush.msra.mxu0 0.0
    %39 = vmatpush.msra.mxu0 0.0
    %40 = vmatpush.msra.mxu0 0.0
    %41 = vmatpush.msra.mxu0 0.0
    %42 = vmatpush.msra.mxu0 0.0
    %43 = vmatpush.msra.mxu0 %v22
    %44 = vmatpush.msra.mxu0 %v21
    %45 = vmatpush.msra.mxu0 %v20
    %46 = vmatpush.msra.mxu0 %v19
    %47 = vmatmul.f32.gmra.mxu0 %v29
    %v48 = vpop.f32.mrf.mxu0
    %v49 = vadd.f32 %v25, %v48
    %50 = vdwg.mxu0
    %v51 = vmax.f32 %v49, 0.0
    %v52 = vld [vmem:[%s3] sm:$0x1]
    %v54 = vperm.slane %v52, 0
    %v56 = vmul.f32 %v51, %v54
    %57 = vxpose.xlu0.b32.start [1/16] %v56, 128
    %58 = vxpose.xlu0.b32.cont [2/16] 0.0, 128
    %59 = vxpose.xlu0.b32.cont [3/16] 0.0, 128
    %60 = vxpose.xlu0.b32.cont [4/16] 0.0, 128
    %61 = vxpose.xlu0.b32.cont [5/16] 0.0, 128
    %62 = vxpose.xlu0.b32.cont [6/16] 0.0, 128
    %63 = vxpose.xlu0.b32.cont [7/16] 0.0, 128
    %64 = vxpose.xlu0.b32.cont [8/16] 0.0, 128
    %65 = vxpose.xlu0.b32.cont [9/16] 0.0, 128
    %66 = vxpose.xlu0.b32.cont [10/16] 0.0, 128
    %67 = vxpose.xlu0.b32.cont [11/16] 0.0, 128
    %68 = vxpose.xlu0.b32.cont [12/16] 0.0, 128
    %69 = vxpose.xlu0.b32.cont [13/16] 0.0, 128
    %70 = vxpose.xlu0.b32.cont [14/16] 0.0, 128
    %71 = vxpose.xlu0.b32.cont [15/16] 0.0, 128
    %72 = vxpose.xlu0.b32.end [16/16] 0.0, 128
    %v73 = vpop.trf.xlu0
    %v74 = vpop.trf.xlu0
    %v75 = vpop.trf.xlu0
    %v76 = vpop.trf.xlu0
    %v77 = vpop.trf.xlu0
    %v78 = vpop.trf.xlu0
    %v79 = vpop.trf.xlu0
    %v80 = vpop.trf.xlu0
    %v81 = vpop.trf.xlu0
    %v82 = vpop.trf.xlu0
    %v83 = vpop.trf.xlu0
    %v84 = vpop.trf.xlu0
    %v85 = vpop.trf.xlu0
    %v86 = vpop.trf.xlu0
    %v87 = vpop.trf.xlu0
    %v88 = vpop.trf.xlu0
    %vm89 = vcmask 15360
    %v90 = vsel %vm89, %v73, 0.0
    %v91 = vrot.slane %v90, 4
    %v92 = vadd.f32 %v90, %v91
    %v93 = vrot.slane %v92, 2
    %v94 = vadd.f32 %v92, %v93
    %v95 = vrot.slane %v94, 1
    %v96 = vadd.f32 %v94, %v95
    %v97 = vsub.f32 0.0, %v96
    %v98 = vmul.f32 %v97, 1.442695
    %v99 = vpow.pop %v98
    %v100 = vadd.f32 %v99, 1.0
    %v101 = vrcp.pop %v100
    %v102 = vmul.f32 %v100, %v101
    %v103 = vsub.f32 1.0, %v102
    %v104 = vmul.f32 %v101, %v103
    %v105 = vadd.f32 %v101, %v104
    %vm106 = vweird.f32 %v100
    %vm107 = vweird.f32 %v101
    %vm108 = vmor %vm106, %vm107
    %v109 = vsel %vm108, %v101, %v105
    %v110 = vand.u32 2147483647, %v100
    %vm111 = vcmp.eq.f32.partialorder %v110, 8.507059e+37
    %v112 = vand.u32 %v100, 2147483648
    %v113 = vor.u32 1.1754944e-38, %v112
    %v114 = vsel %vm111, %v113, %v109
    %v115 = vmul.f32 1.0, %v114
    %vm116 = vcmask 8192
    %117 = vst.msk [vmem:[#allocation2] sm:$0x1] %vm116, %v115
    // Predicated region
    $region18: #{tpu_custom_call.1} parent=1 // pred_check
      _
    $region19: #{tpu_custom_call.1} parent=1 // pred_check_branch
      %119 = sbr.rel (0) target = $region21
    $region20: #{tpu_custom_call.1} parent=1 // pred_region
      %121 = vsyncadd [#allocation3], 0
      %s123 = sshll.u32 [#allocation2], 4
      %s124 = int_to_ptr.vmem [resolvable:$true] %s123
      %s125 = sshll.u32 %s4, 4
      %s126 = int_to_ptr.hbm [resolvable:$true] %s125
      %128 = dma.vmem_to_hbm [thread:$0]  %s124, 16, %s126, [#allocation3]
    $region21: #{tpu_custom_call.1} parent=1 // pred_fallthru
      _
    // Predicated region
    $region22: #{tpu_custom_call.1} parent=1 // pred_check
      _
    $region23: #{tpu_custom_call.1} parent=1 // pred_check_branch
      %130 = sbr.rel (0) target = $region25
    $region24: #{tpu_custom_call.1} parent=1 // pred_region
      %132 = dma.done [#allocation3], 16
    $region25: #{tpu_custom_call.1} parent=1 // pred_fallthru
      _
    %133 = vsyncpa [#allocation3], 1

</llo_original>
